<compile_context>
chip_gen: v6e
topology: v6e:2x2x1
jax: 0.10.0
libtpu: 0.0.40
codegen_flags: <defaults>
</compile_context>

<pallas_src>
import functools

import jax
import jax.numpy as jnp
from jax.experimental import pallas as pl
from jax.experimental.pallas import tpu as pltpu


def _cdiv(a, b):
    return -(-a // b)


def _budgets():
    """Generation-gated (vmem_limit_bytes, per-input-buffer byte budget)."""
    vmem_cap = 64 * 1024 * 1024
    try:
        info = pltpu.get_tpu_info()
        vmem_cap = int(getattr(info, "vmem_capacity_bytes", vmem_cap))
    except Exception:
        pass
    if vmem_cap >= 96 * 1024 * 1024:          # v5e / v6e: 128 MiB physical VMEM
        return 64 * 1024 * 1024, 8 * 1024 * 1024
    return 32 * 1024 * 1024, 4 * 1024 * 1024  # v7x: 64 MiB physical VMEM


# ---------------------------------------------------------------------------
# Kernel 1: partial row sums over the trailing axis of an (M, K) view.
#   grid = (splits [parallel], M tiles [parallel], K tiles [arbitrary]).
#   output: (n_splits, M, 1) f32 partial sums (one slab per K split).
# ---------------------------------------------------------------------------
def _row_sum_kernel(x_ref, o_ref, acc_ref, *, tk, rem, single_k, mask_k):
    if single_k:
        # Whole reduction in one K step: single cross-lane reduce, no acc.
        x = x_ref[...].astype(jnp.float32)
        o_ref[0, :, :] = jnp.sum(x, axis=-1, keepdims=True)
        return

    k = pl.program_id(2)

    @pl.when(k == 0)
    def _():
        acc_ref[...] = jnp.zeros_like(acc_ref)

    n_chunks = tk // 128  # tk is a multiple of 128 on the pipelined path

    def _accum_plain():
        # Chunked load+upcast: keeps the live set to one 128-lane slab.
        partial = x_ref[:, 0:128].astype(jnp.float32)
        for j in range(1, n_chunks):
            partial = partial + x_ref[:, j * 128:(j + 1) * 128].astype(jnp.float32)
        acc_ref[...] += partial

    if mask_k:
        # Ragged tail only exists in the globally-last K block; its valid
        # column count `rem` is static, so mask work is confined to one step
        # and to the single straddling 128-lane chunk.
        n_full = rem // 128
        tail = rem - n_full * 128
        is_last_global = jnp.logical_and(
            pl.program_id(0) == pl.num_programs(0) - 1,
            k == pl.num_programs(2) - 1)

        @pl.when(jnp.logical_not(is_last_global))
        def _():
            _accum_plain()

        @pl.when(is_last_global)
        def _():
            parts = []
            for j in range(n_full):
                parts.append(x_ref[:, j * 128:(j + 1) * 128].astype(jnp.float32))
            if tail > 0:
                c = x_ref[:, n_full * 128:(n_full + 1) * 128].astype(jnp.float32)
                lane = jax.lax.broadcasted_iota(jnp.int32, c.shape, 1)
                parts.append(jnp.where(lane < tail, c, 0.0))
            partial = parts[0]
            for p in parts[1:]:
                partial = partial + p
            acc_ref[...] += partial
    else:
        _accum_plain()

    @pl.when(k == pl.num_programs(2) - 1)
    def _():
        # One XLU cross-lane reduce per (split, M-tile).
        o_ref[0, :, :] = jnp.sum(acc_ref[...], axis=-1, keepdims=True)


def _row_sums(x2d):
    """Returns (n_splits, M, 1) f32 partial row sums of a 2-D array."""
    M, K = x2d.shape
    vmem_limit, budget = _budgets()
    itemsize = jnp.dtype(x2d.dtype).itemsize

    tm = M if M < 256 else 256                     # kept-dim tile (parallel)
    cap = (budget // (tm * itemsize)) // 128 * 128  # lane tile, budget-bounded
    cap = min(max(cap, 128), 8192)

    if K <= cap:
        tk, single_k = K, True                     # exact full extent (legal)
    else:
        tk, single_k = cap, False                  # multiple of 128, K walk
    mask_k = (not single_k) and (K % tk != 0)

    m_tiles = _cdiv(M, tm)
    nk = _cdiv(K, tk)

    # v7x has 2 TensorCores: if the only >1 grid axis would be the sequential
    # K walk, split K two ways along a *parallel* axis; combined in wrapper.
    n_splits = 2 if (not single_k and m_tiles == 1 and nk >= 4 and nk % 2 == 0) else 1
    nk_per = nk // n_splits

    rem = (K - (nk - 1) * tk) if mask_k else 0
    kernel = functools.partial(_row_sum_kernel, tk=tk, rem=rem,
                               single_k=single_k, mask_k=mask_k)

    return pl.pallas_call(
        kernel,
        out_shape=jax.ShapeDtypeStruct((n_splits, M, 1), jnp.float32),
        grid_spec=pltpu.PrefetchScalarGridSpec(
            num_scalar_prefetch=0,
            grid=(n_splits, m_tiles, nk_per),
            in_specs=[pl.BlockSpec((tm, tk),
                                   lambda s, i, k: (i, s * nk_per + k))],
            out_specs=pl.BlockSpec((1, tm, 1), lambda s, i, k: (s, i, 0)),
            scratch_shapes=[pltpu.VMEM((tm, 128), jnp.float32)],
        ),
        compiler_params=pltpu.CompilerParams(
            dimension_semantics=("parallel", "parallel", "arbitrary"),
            vmem_limit_bytes=vmem_limit,
        ),
    )(x2d)


# ---------------------------------------------------------------------------
# Kernel 2: sum over the MIDDLE axis of a (P, K, Q) view (no transpose).
#   P-blocked: block (tp, tk, tq), grid (P tiles, Q tiles, K tiles).
# ---------------------------------------------------------------------------
def _mid_sum_kernel(x_ref, o_ref, acc_ref, *, rem, single_k):
    if single_k:
        o_ref[...] = jnp.sum(x_ref[...].astype(jnp.float32), axis=1, keepdims=True)
        return

    k = pl.program_id(2)
    nk = pl.num_programs(2)

    @pl.when(k == 0)
    def _():
        acc_ref[...] = jnp.zeros_like(acc_ref)

    if rem == 0:
        acc_ref[...] += jnp.sum(x_ref[...].astype(jnp.float32), axis=1,
                                keepdims=True)
    else:
        # Ragged tail gated to the last K step; static sublane slice -> no
        # per-step iota/where on the hot path.
        @pl.when(k < nk - 1)
        def _():
            acc_ref[...] += jnp.sum(x_ref[...].astype(jnp.float32), axis=1,
                                    keepdims=True)

        @pl.when(k == nk - 1)
        def _():
            acc_ref[...] += jnp.sum(x_ref[:, 0:rem, :].astype(jnp.float32),
                                    axis=1, keepdims=True)

    @pl.when(k == nk - 1)
    def _():
        o_ref[...] = acc_ref[...]


def _mid_sums(x3d):
    """Returns (P, 1, Q) f32 sums over the middle axis of a (P, K, Q) array."""
    P, K, Q = x3d.shape
    vmem_limit, budget = _budgets()
    itemsize = jnp.dtype(x3d.dtype).itemsize

    tq = Q if Q <= 2048 else 2048                  # lane tile (mult of 128 / full)
    full_k_bytes = K * tq * itemsize
    if full_k_bytes <= budget:
        tk, single_k = K, True
        # Block the P axis to reach MB-scale DMA bursts; also cap so the
        # (tp, 1, tq) f32 output/acc blocks stay within the budget.
        tp = max(1, min(P, budget // max(full_k_bytes, tq * 4)))
    else:
        tp = 1
        tk = max((budget // (tq * itemsize)) // 8 * 8, 8)
        single_k = False
    rem = K % tk if (not single_k and K % tk != 0) else 0

    grid = (_cdiv(P, tp), _cdiv(Q, tq), _cdiv(K, tk))
    kernel = functools.partial(_mid_sum_kernel, rem=rem, single_k=single_k)

    return pl.pallas_call(
        kernel,
        out_shape=jax.ShapeDtypeStruct((P, 1, Q), jnp.float32),
        grid_spec=pltpu.PrefetchScalarGridSpec(
            num_scalar_prefetch=0,
            grid=grid,
            in_specs=[pl.BlockSpec((tp, tk, tq), lambda p, q, k: (p, k, q))],
            out_specs=pl.BlockSpec((tp, 1, tq), lambda p, q, k: (p, 0, q)),
            scratch_shapes=[pltpu.VMEM((tp, 1, tq), jnp.float32)],
        ),
        compiler_params=pltpu.CompilerParams(
            dimension_semantics=("parallel", "parallel", "arbitrary"),
            vmem_limit_bytes=vmem_limit,
        ),
    )(x3d)


# ---------------------------------------------------------------------------
# Wrapper: torch.Tensor.mean(dim, keepdim) semantics.
# ---------------------------------------------------------------------------
def pallas_mean(x, dim, keepdim):
    ndim = x.ndim
    dims = (dim,) if isinstance(dim, int) else tuple(dim)
    dims = tuple(sorted(d % ndim for d in dims))
    kept = tuple(i for i in range(ndim) if i not in dims)
    shape = x.shape

    if keepdim:
        out_shape = tuple(1 if i in dims else shape[i] for i in range(ndim))
    else:
        out_shape = tuple(shape[i] for i in kept)

    # torch.mean rejects integer inputs; promote to a float32 result here.
    out_dtype = x.dtype if jnp.issubdtype(x.dtype, jnp.floating) else jnp.float32

    K = 1
    for i in dims:
        K *= shape[i]
    contiguous = all(b == a + 1 for a, b in zip(dims, dims[1:]))
    inv = jnp.float32(1.0 / K)

    if contiguous and dims[-1] == ndim - 1:
        # Trailing reduction block: free reshape to (M, K).
        M = 1
        for i in kept:
            M *= shape[i]
        sums = _row_sums(jnp.reshape(x, (M, K)))           # (n_splits, M, 1) f32
        out = jnp.sum(sums, axis=0)[:, 0] * inv            # (M,)
    elif contiguous:
        # Interior reduction block: free reshape to (P, K, Q), reduce middle
        # axis in-kernel -> no HBM transpose copy (e.g. dim=1 in NCHW).
        P = 1
        for i in range(dims[0]):
            P *= shape[i]
        Q = 1
        for i in range(dims[-1] + 1, ndim):
            Q *= shape[i]
        sums = _mid_sums(jnp.reshape(x, (P, K, Q)))        # (P, 1, Q) f32
        out = sums[:, 0, :] * inv                          # (P, Q)
    else:
        # TODO(synk): non-contiguous reduced dims still pay an HBM transpose
        # copy before the kernel; a dedicated multi-axis grid walk would avoid it.
        perm = kept + dims
        M = 1
        for i in kept:
            M *= shape[i]
        sums = _row_sums(jnp.reshape(jnp.transpose(x, perm), (M, K)))
        out = jnp.sum(sums, axis=0)[:, 0] * inv

    return jnp.reshape(out.astype(out_dtype), out_shape)


if __name__ == "__main__":
    key = jax.random.PRNGKey(0)
    x = jax.random.normal(key, (2, 4, 16, 16), dtype=jnp.float32)

    # Case 1: spatial mean, keepdim=True  (Mean(dim=(2, 3), keepdim=True)).
    y1 = pallas_mean(x, dim=(2, 3), keepdim=True)
    jax.block_until_ready(y1)
    ref1 = jnp.mean(x, axis=(2, 3), keepdims=True)
    assert y1.shape == (2, 4, 1, 1)
    assert jnp.allclose(y1, ref1, atol=1e-5, rtol=1e-5)

    # Case 2: channel mean, keepdim=False (interior-axis, P-blocked kernel).
    y2 = pallas_mean(x, dim=1, keepdim=False)
    jax.block_until_ready(y2)
    ref2 = jnp.mean(x, axis=1, keepdims=False)
    assert y2.shape == (2, 16, 16)
    assert jnp.allclose(y2, ref2, atol=1e-5, rtol=1e-5)

    # Case 3: trailing reduction with K not a multiple of 128 (single-step).
    x3 = jax.random.normal(jax.random.PRNGKey(1), (4, 200), dtype=jnp.float32)
    y3 = pallas_mean(x3, dim=1, keepdim=False)
    jax.block_until_ready(y3)
    ref3 = jnp.mean(x3, axis=1)
    assert y3.shape == (4,)
    assert jnp.allclose(y3, ref3, atol=1e-5, rtol=1e-5)

    # Case 4: small-M / large ragged K: exercises the pipelined K walk, the
    # pl.when-gated ragged tail, and the 2-way parallel K split.
    x4 = jax.random.normal(jax.random.PRNGKey(2), (4, 30000), dtype=jnp.float32)
    y4 = pallas_mean(x4, dim=1, keepdim=True)
    jax.block_until_ready(y4)
    ref4 = jnp.mean(x4, axis=1, keepdims=True)
    assert y4.shape == (4, 1)
    assert jnp.allclose(y4, ref4, atol=1e-4, rtol=1e-4)

    print("KERNEL_OK")
</pallas_src>

<mosaic_0001>
module attributes {stable_mosaic.version = 11 : i64} {
  func.func @_row_sum_kernel(%arg0: i32, %arg1: i32, %arg2: i32, %arg3: memref<8x256xf32, #tpu.memory_space<vmem>>, %arg4: memref<1x8x1xf32, #tpu.memory_space<vmem>>, %arg5: memref<8x128xf32, #tpu.memory_space<vmem>>) attributes {dimension_semantics = [#tpu.dimension_semantics<parallel>, #tpu.dimension_semantics<parallel>, #tpu.dimension_semantics<arbitrary>], iteration_bounds = array<i64: 1, 1, 1>, scalar_prefetch = 0 : i64, scratch_operands = 1 : i64, tpu.core_type = #tpu.core_type<tc>, window_params = [{transform_indices = @transform_0, window_bounds = array<i64: 8, 256>}, {transform_indices = @transform_1, window_bounds = array<i64: 1, 8, 1>}]} {
    %c0 = arith.constant 0 : index
    %c0_0 = arith.constant 0 : index
    %0 = vector.load %arg3[%c0, %c0_0] : memref<8x256xf32, #tpu.memory_space<vmem>>, vector<8x256xf32>
    %cst = arith.constant dense<0.000000e+00> : vector<8xf32>
    %1 = vector.multi_reduction <add>, %0, %cst [1] : vector<8x256xf32> to vector<8xf32>
    %2 = vector.shape_cast %1 : vector<8xf32> to vector<8x1xf32>
    %c0_1 = arith.constant 0 : index
    %c0_2 = arith.constant 0 : index
    %c0_3 = arith.constant 0 : index
    %3 = vector.load %arg4[%c0_1, %c0_2, %c0_3] : memref<1x8x1xf32, #tpu.memory_space<vmem>>, vector<1x8x1xf32>
    %4 = vector.shape_cast %3 : vector<1x8x1xf32> to vector<8x1xf32>
    %5 = vector.shape_cast %2 : vector<8x1xf32> to vector<1x8x1xf32>
    tpu.vector_store %arg4[%c0_1, %c0_2, %c0_3], %5 {strides = array<i32>} : memref<1x8x1xf32, #tpu.memory_space<vmem>>, vector<1x8x1xf32>,
    return
  }
  func.func @transform_0(%arg0: i32, %arg1: i32, %arg2: i32) -> (i32, i32) {
    %c1_i32 = arith.constant 1 : i32
    %0 = arith.muli %arg0, %c1_i32 : i32
    %1 = arith.addi %0, %arg2 : i32
    %c0_i32 = arith.constant 0 : i32
    return %arg1, %1 : i32, i32
  }
  func.func @transform_1(%arg0: i32, %arg1: i32, %arg2: i32) -> (i32, i32, i32) {
    %c0_i32 = arith.constant 0 : i32
    %c0_i32_0 = arith.constant 0 : i32
    return %arg0, %arg1, %c0_i32 : i32, i32, i32
  }
}

</mosaic_0001>

<llo_original>
// kernel: tpu_custom_call.1
$region0: #{tpu_custom_call.1}
  #allocation0 [shape = 'u32[]', space=smem, size = 0x4, offset = 0x4, fixed_abs, tag = 'smem constant byte address 0x4 - core index']
  #allocation1 [shape = 'u32[144,128]{1,0:T(1,128)}', space=vmem, size = 0x12000, scoped, tag = 'internal scratch']
  #allocation2 [shape = 'f32[8,128]{1,0:T(8,128)}', space=vmem, size = 0x1000, scoped, tag = 'scratch operand']
  %s0 = inlined_call_operand.hbm [shape: f32[8,256], index: 0, kind: input, shape index: {}]
  %s1 = inlined_call_operand.vmem [shape: f32[1,8,1], index: 1, kind: output, shape index: {}]
  %s2 = sld [smem:[#allocation0]]
  $region18: #{tpu_custom_call.1} parent=0
    _
  %s4 = ssub.s32 1, %s2
  %s5 = scalar_select 0, %s4, %s2
  $region1: #{tpu_custom_call.1} parent=0
    #allocation3 [shape = 'u8[8192]{0}', space=vmem, size = 0x2000, scoped, tag = 'input window, operand 0, single buffered']
    #allocation4 [shape = 's32[1]{0}', space=sflag, size = 0x4, scoped, tag = 'scoped memory for tpu_custom_call.1']
    %6 = vsyncpa [#allocation4], 0
    // Predicated region
    $region2: #{tpu_custom_call.1} parent=1 // pred_check
      _
    $region3: #{tpu_custom_call.1} parent=1 // pred_check_branch
      %8 = sbr.rel (0) target = $region5
    $region4: #{tpu_custom_call.1} parent=1 // pred_region
      %s9 = sadd.s32 0, 0
      %s10 = smul.u32 2, %s9
      %s12 = ssub.s32 256, 256
      %13 = vsyncadd [#allocation4], %s12
      %s14 = smul.addr %s10, 128
      %s15 = scalar_lea.hbm %s0, %s14
      %s17 = sshll.u32 [#allocation3], 4
      %s18 = int_to_ptr.vmem [resolvable:$true] %s17
      %20 = dma.hbm_to_vmem [thread:$0]  %s15, 256, %s18, [#allocation4]
    $region5: #{tpu_custom_call.1} parent=1 // pred_fallthru
      _
    // Predicated region
    $region6: #{tpu_custom_call.1} parent=1 // pred_check
      _
    $region7: #{tpu_custom_call.1} parent=1 // pred_check_branch
      %22 = sbr.rel (0) target = $region9
    $region8: #{tpu_custom_call.1} parent=1 // pred_region
      %23 = dma.done [#allocation4], 256
    $region9: #{tpu_custom_call.1} parent=1 // pred_fallthru
      _
    %s24 = sadd.s32 0, 0
    %s25 = smul.u32 2, %s24
    %v26 = vld [vmem:[#allocation3] sm:$0xff]
    %v27 = vld [vmem:[#allocation3 + $0x8] sm:$0xff]
    %v28 = vadd.f32 %v26, %v27
    %29 = vadd.xlane.f32.xlu0 %v28
    %v30 = vpop.xlane.xlu0 %29
    %vm31 = vcmask 7168
    %32 = vst.msk [vmem:[%s1] sm:$0xff] %vm31, %v30
    // Predicated region
    $region10: #{tpu_custom_call.1} parent=1 // pred_check
      _
    $region11: #{tpu_custom_call.1} parent=1 // pred_check_branch
      %34 = sbr.rel (0) target = $region13
    $region12: #{tpu_custom_call.1} parent=1 // pred_region
      _
    $region13: #{tpu_custom_call.1} parent=1 // pred_fallthru
      _
    // Predicated region
    $region14: #{tpu_custom_call.1} parent=1 // pred_check
      _
    $region15: #{tpu_custom_call.1} parent=1 // pred_check_branch
      %36 = sbr.rel (0) target = $region17
    $region16: #{tpu_custom_call.1} parent=1 // pred_region
      _
    $region17: #{tpu_custom_call.1} parent=1 // pred_fallthru
      _
    %37 = vsyncpa [#allocation4], 1

</llo_original>
